<compile_context>
chip_gen: v7x
topology: tpu7x:2x2x1
jax: 0.10.0
libtpu: 0.0.40
codegen_flags: <defaults>
</compile_context>

<pallas_src>
import numpy as np
import jax
import jax.numpy as jnp
from jax import lax
from jax.experimental import pallas as pl
from jax.experimental.pallas import tpu as pltpu

LANE = 128
ACC_ROWS_WIDE = 64                 # 8 vregs of f32 accumulator per parallel slice
_PALLAS_MIN_ELEMS = 1 << 20        # below this, fused XLA beats kernel fixed cost


def _round_up(v: int, m: int) -> int:
    return -(-v // m) * m


def _sublane_pack(dtype) -> int:
    """Minimum sublane multiple for a packed dtype (8 f32 / 16 bf16 / 32 int8)."""
    return {1: 32, 2: 16, 4: 8}.get(int(jnp.dtype(dtype).itemsize), 8)


def _tpu_generation_params():
    """(n_split, per-input per-buffer tile byte budget) for the local TPU generation."""
    try:
        kind = jax.devices()[0].device_kind.lower()
    except Exception:
        kind = ""
    if "v5" in kind and ("lite" in kind or "v5e" in kind):
        return 1, 2 << 20            # v5e: 1 TC, ~0.82 TB/s — 2 MiB tiles already ~93% roofline
    if "v6" in kind:
        return 1, 4 << 20            # v6e: 1 TC, ~1.4 TB/s
    if "v7" in kind or "tpu7" in kind:
        return 2, 6 << 20            # v7x: 2 TCs, ~3.2 TB/s, 64 MiB VMEM — big tiles + both cores
    if "v4" in kind:
        return 2, 2 << 20            # v4: 2 TCs (megacore)
    return 1, 4 << 20                # conservative default


def _make_sq_diff_kernel(steps: int, tile_rows: int, acc_rows: int,
                         rows: int, needs_mask: bool):
    groups = tile_rows // acc_rows

    def kernel(x_ref, y_ref, out_ref):
        c = pl.program_id(0)          # "parallel" axis (TensorCores on 2-TC parts)
        i = pl.program_id(1)          # "arbitrary" reduction axis

        # Native-dtype DMA; per-tile cast to f32 inside the kernel.
        d = x_ref[...].astype(jnp.float32) - y_ref[...].astype(jnp.float32)
        sq = d * d

        if needs_mask:
            # Zero contributions from rows past the (un-padded) end of the input.
            # `rows` is a compile-time constant; this code is only emitted when
            # the grid coverage actually exceeds `rows`.  Select (not multiply)
            # so garbage (NaN/inf) in the padded VMEM region cannot leak in.
            block_start = (c * steps + i) * tile_rows
            row_ids = lax.broadcasted_iota(jnp.int32, (tile_rows, LANE), 0)
            sq = jnp.where(row_ids < (rows - block_start), sq, 0.0)

        if groups > 1:
            # Fold (tile_rows,128) -> (acc_rows,128): the reshape splits the
            # sublane axis on (8,128)-aligned boundaries (no data movement) and
            # the axis-0 sum is acc_rows/8 independent VPU add chains.
            partial = jnp.sum(sq.reshape(groups, acc_rows, LANE), axis=0)
        else:
            partial = sq

        @pl.when(i == 0)
        def _():
            out_ref[...] = partial          # write-on-first-step (no zero-init pass)

        @pl.when(i != 0)
        def _():
            out_ref[...] += partial

    return kernel


def _sum_sq_diff_pallas(xf, yf, rows: int):
    """Sum of squared differences of two flat, 128-divisible arrays (Pallas)."""
    itemsize = int(jnp.dtype(xf.dtype).itemsize)
    pack = _sublane_pack(xf.dtype)
    n_split, tile_budget = _tpu_generation_params()

    if rows < n_split * pack:             # degenerate split buys nothing
        n_split = 1

    max_tile_rows = max(pack, (tile_budget // (LANE * itemsize)) // pack * pack)
    tile_rows = min(max_tile_rows, _round_up(pl.cdiv(rows, n_split), pack))
    if tile_rows >= ACC_ROWS_WIDE:
        tile_rows = _round_up(tile_rows, ACC_ROWS_WIDE)
        acc_rows = ACC_ROWS_WIDE
    else:
        acc_rows = tile_rows              # small forced inputs: accumulator == tile

    steps = pl.cdiv(rows, n_split * tile_rows)
    covered = n_split * steps * tile_rows
    needs_mask = covered != rows
    last_block = pl.cdiv(rows, tile_rows) - 1

    # Free bitcast reshapes — no padding, no extra HBM traffic.
    x2 = xf.reshape(rows, LANE)
    y2 = yf.reshape(rows, LANE)

    def in_map(c, i):
        # Clamp so a (rare) fully-out-of-range trailing block re-reads the last
        # valid block; its contribution is zeroed by the in-kernel mask.
        return (jnp.minimum(c * steps + i, last_block), 0)

    cost = pl.CostEstimate(
        flops=3 * rows * LANE,
        transcendentals=0,
        bytes_accessed=2 * rows * LANE * itemsize + n_split * acc_rows * LANE * 4,
    )

    # 2 inputs x 2 pipeline buffers x tile, plus output/accumulator headroom.
    vmem_limit = int(max(16 << 20, 4 * tile_rows * LANE * itemsize + (4 << 20)))

    partials = pl.pallas_call(
        _make_sq_diff_kernel(steps, tile_rows, acc_rows, rows, needs_mask),
        out_shape=jax.ShapeDtypeStruct((n_split * acc_rows, LANE), jnp.float32),
        grid_spec=pltpu.PrefetchScalarGridSpec(
            num_scalar_prefetch=0,
            grid=(n_split, steps),
            in_specs=[
                pl.BlockSpec((tile_rows, LANE), in_map),
                pl.BlockSpec((tile_rows, LANE), in_map),
            ],
            out_specs=pl.BlockSpec((acc_rows, LANE), lambda c, i: (c, 0)),
        ),
        compiler_params=pltpu.CompilerParams(
            dimension_semantics=("parallel", "arbitrary"),
            vmem_limit_bytes=vmem_limit,
        ),
        cost_estimate=cost,
    )(x2, y2)

    # Single cross-lane reduce of the tiny (n_split*acc_rows, 128) partial buffer.
    return jnp.sum(partials)


def _sum_sq_diff(x, y, *, force_pallas: bool = False):
    """Sum of squared element-wise differences of two equal-shape arrays."""
    assert x.shape == y.shape
    n = int(np.prod(x.shape))
    xf = x.reshape(-1)
    yf = y.reshape(-1)

    rows = n // LANE
    lane_aligned = (n % LANE == 0)
    pack = _sublane_pack(x.dtype)
    use_pallas = (lane_aligned and rows >= pack
                  and (force_pallas or n >= _PALLAS_MIN_ELEMS))

    if not use_pallas:
        # Tiny or non-128-divisible inputs: a fused XLA reduce is faster than the
        # kernel's launch/pipeline fixed cost and avoids any HBM padding copy.
        d = xf.astype(jnp.float32) - yf.astype(jnp.float32)
        return jnp.sum(d * d)

    return _sum_sq_diff_pallas(xf, yf, rows)


def inversion_loss_with_space(x, y, x_latent, mean_latents, max_distance, lmbda,
                              *, force_pallas: bool = False):
    """Forward pass of InversionLossWithSpace."""
    assert x.shape == y.shape
    n_xy = int(np.prod(x.shape))

    # Heavy, bandwidth-bound part: MSE(x, y) via the Pallas kernel.
    mse_xy = _sum_sq_diff(x, y, force_pallas=force_pallas) / jnp.float32(n_xy)

    # Latent path (~1K elements) + scalar conditional: plain XLA.
    ml = mean_latents.reshape(-1).astype(jnp.float32)
    xl = x_latent.reshape(-1).astype(jnp.float32)
    dist_to_center = jnp.mean((ml - xl) ** 2)
    # NOTE: the source module compares an MSE against a Euclidean (cdist) max
    # distance; that unit mismatch is preserved verbatim to match its semantics.
    penalty = jnp.where(dist_to_center >= jnp.float32(max_distance),
                        dist_to_center * jnp.float32(lmbda),
                        jnp.float32(0.0))
    return mse_xy + penalty


if __name__ == "__main__":
    key = jax.random.PRNGKey(0)
    k1, k2, k3, k4 = jax.random.split(key, 4)

    # "Module init": deterministic synthetic latents (list of N latent tensors).
    num_latents, latent_dim = 6, 1024
    lmbda = 0.5
    latents_np = np.asarray(
        jax.random.normal(k1, (num_latents, latent_dim), dtype=jnp.float32)
    )
    mean_latents_np = latents_np.mean(axis=0).reshape(-1)        # flatten()
    # max_distance = max Euclidean (cdist-default) distance from mean to each latent.
    max_distance = float(
        np.max(np.linalg.norm(latents_np - mean_latents_np[None, :], axis=1))
    )

    # forward inputs (NCHW)
    x = jax.random.normal(k2, (2, 4, 16, 16), dtype=jnp.float32)
    y = jax.random.normal(k3, (2, 4, 16, 16), dtype=jnp.float32)
    x_latent = jax.random.normal(k4, (1, latent_dim), dtype=jnp.float32)
    mean_latents = jnp.asarray(mean_latents_np)

    # force_pallas=True so the demo-sized input actually exercises the kernel
    # (production-sized inputs hit the Pallas path automatically at >=1M elems).
    loss = inversion_loss_with_space(x, y, x_latent, mean_latents, max_distance,
                                     lmbda, force_pallas=True)
    loss = jax.block_until_ready(loss)

    # pure-JAX reference for correctness
    dist_ref = jnp.mean((mean_latents - x_latent.reshape(-1)) ** 2)
    penalty_ref = jnp.where(dist_ref >= max_distance, dist_ref * lmbda, 0.0)
    ref = jnp.mean((x - y) ** 2) + penalty_ref

    if np.allclose(np.asarray(loss), np.asarray(ref), rtol=1e-5, atol=1e-5):
        print("KERNEL_OK")
    else:
        print("MISMATCH", float(loss), float(ref))
</pallas_src>

<mosaic_0001>
module attributes {stable_mosaic.version = 11 : i64} {
  func.func @kernel(%arg0: i32, %arg1: i32, %arg2: memref<16x128xf32, #tpu.memory_space<vmem>>, %arg3: memref<16x128xf32, #tpu.memory_space<vmem>>, %arg4: memref<16x128xf32, #tpu.memory_space<vmem>>) attributes {dimension_semantics = [#tpu.dimension_semantics<parallel>, #tpu.dimension_semantics<arbitrary>], iteration_bounds = array<i64: 1, 1>, scalar_prefetch = 0 : i64, scratch_operands = 0 : i64, tpu.core_type = #tpu.core_type<tc>, window_params = [{transform_indices = @transform_0, window_bounds = array<i64: 16, 128>}, {transform_indices = @transform_1, window_bounds = array<i64: 16, 128>}, {transform_indices = @transform_2, window_bounds = array<i64: 16, 128>}]} {
    %c0 = arith.constant 0 : index
    %c0_0 = arith.constant 0 : index
    %0 = vector.load %arg2[%c0, %c0_0] : memref<16x128xf32, #tpu.memory_space<vmem>>, vector<16x128xf32>
    %c0_1 = arith.constant 0 : index
    %c0_2 = arith.constant 0 : index
    %1 = vector.load %arg3[%c0_1, %c0_2] : memref<16x128xf32, #tpu.memory_space<vmem>>, vector<16x128xf32>
    %2 = arith.subf %0, %1 : vector<16x128xf32>
    %3 = arith.mulf %2, %2 : vector<16x128xf32>
    %c0_i32 = arith.constant 0 : i32
    %4 = arith.cmpi eq, %arg1, %c0_i32 : i32
    %5 = arith.extui %4 : i1 to i32
    %c0_i32_3 = arith.constant 0 : i32
    %6 = arith.cmpi ne, %5, %c0_i32_3 : i32
    scf.if %6 {
      %c0_6 = arith.constant 0 : index
      %c0_7 = arith.constant 0 : index
      %10 = vector.load %arg4[%c0_6, %c0_7] : memref<16x128xf32, #tpu.memory_space<vmem>>, vector<16x128xf32>
      tpu.vector_store %arg4[%c0_6, %c0_7], %3 {strides = array<i32>} : memref<16x128xf32, #tpu.memory_space<vmem>>, vector<16x128xf32>,
    } else {
    }
    %c0_i32_4 = arith.constant 0 : i32
    %7 = arith.cmpi ne, %arg1, %c0_i32_4 : i32
    %8 = arith.extui %7 : i1 to i32
    %c0_i32_5 = arith.constant 0 : i32
    %9 = arith.cmpi ne, %8, %c0_i32_5 : i32
    scf.if %9 {
      %c0_6 = arith.constant 0 : index
      %c0_7 = arith.constant 0 : index
      %10 = vector.load %arg4[%c0_6, %c0_7] : memref<16x128xf32, #tpu.memory_space<vmem>>, vector<16x128xf32>
      %11 = arith.addf %10, %3 : vector<16x128xf32>
      %c0_8 = arith.constant 0 : index
      %c0_9 = arith.constant 0 : index
      %12 = vector.load %arg4[%c0_8, %c0_9] : memref<16x128xf32, #tpu.memory_space<vmem>>, vector<16x128xf32>
      tpu.vector_store %arg4[%c0_8, %c0_9], %11 {strides = array<i32>} : memref<16x128xf32, #tpu.memory_space<vmem>>, vector<16x128xf32>,
    } else {
    }
    return
  }
  func.func @transform_0(%arg0: i32, %arg1: i32) -> (i32, i32) {
    %c1_i32 = arith.constant 1 : i32
    %0 = arith.muli %arg0, %c1_i32 : i32
    %1 = arith.addi %0, %arg1 : i32
    %c0_i32 = arith.constant 0 : i32
    %2 = arith.minsi %1, %c0_i32 : i32
    %c0_i32_0 = arith.constant 0 : i32
    %c0_i32_1 = arith.constant 0 : i32
    return %2, %c0_i32_0 : i32, i32
  }
  func.func @transform_1(%arg0: i32, %arg1: i32) -> (i32, i32) {
    %c1_i32 = arith.constant 1 : i32
    %0 = arith.muli %arg0, %c1_i32 : i32
    %1 = arith.addi %0, %arg1 : i32
    %c0_i32 = arith.constant 0 : i32
    %2 = arith.minsi %1, %c0_i32 : i32
    %c0_i32_0 = arith.constant 0 : i32
    %c0_i32_1 = arith.constant 0 : i32
    return %2, %c0_i32_0 : i32, i32
  }
  func.func @transform_2(%arg0: i32, %arg1: i32) -> (i32, i32) {
    %c0_i32 = arith.constant 0 : i32
    %c0_i32_0 = arith.constant 0 : i32
    return %arg0, %c0_i32 : i32, i32
  }
}

</mosaic_0001>

<llo_original>
// kernel: tpu_custom_call.1
$region0: #{tpu_custom_call.1}
  #allocation0 [shape = 'u32[]', space=smem, size = 0x4, offset = 0x4, fixed_abs, tag = 'smem constant byte address 0x4 - core index']
  #allocation1 [shape = 'u32[144,128]{1,0:T(1,128)}', space=vmem, size = 0x12000, scoped, tag = 'internal scratch']
  %s0 = inlined_call_operand.hbm [shape: f32[16,128], index: 0, kind: input, shape index: {}]
  %s1 = inlined_call_operand.hbm [shape: f32[16,128], index: 1, kind: input, shape index: {}]
  %s2 = inlined_call_operand.hbm [shape: f32[16,128], index: 2, kind: output, shape index: {}]
  %s3 = sld [smem:[#allocation0]]
  $region34: #{tpu_custom_call.1} parent=0
    _
  %s5 = ssub.s32 1, %s3
  %s6 = scalar_select 0, %s5, %s3
  $region1: #{tpu_custom_call.1} parent=0
    #allocation2 [shape = 'u8[8192]{0}', space=vmem, size = 0x2000, scoped, tag = 'input window, operand 0, single buffered']
    #allocation3 [shape = 's32[1]{0}', space=sflag, size = 0x4, scoped, tag = 'scoped memory for tpu_custom_call.1']
    #allocation4 [shape = 's32[1]{0}', space=sflag, size = 0x4, scoped, tag = 'scoped memory for tpu_custom_call.1']
    #allocation5 [shape = 'u8[8192]{0}', space=vmem, size = 0x2000, scoped, tag = 'input window, operand 1, single buffered']
    #allocation6 [shape = 's32[1]{0}', space=sflag, size = 0x4, scoped, tag = 'scoped memory for tpu_custom_call.1']
    #allocation7 [shape = 'u8[8192]{0}', space=vmem, size = 0x2000, scoped, tag = 'output window, operand 0, single buffered']
    %7 = vsyncpa [#allocation3], 0
    %8 = vsyncpa [#allocation6], 0
    %9 = vsyncpa [#allocation4], 0
    // Predicated region
    $region2: #{tpu_custom_call.1} parent=1 // pred_check
      _
    $region3: #{tpu_custom_call.1} parent=1 // pred_check_branch
      %11 = sbr.rel (0) target = $region5
    $region4: #{tpu_custom_call.1} parent=1 // pred_region
      %s12 = sadd.s32 0, 0
      %p13 = scmp.lt.s32.totalorder %s12, 0
      %s14 = scalar_select %p13, %s12, 0
      %s15 = smul.u32 2, %s14
      %s17 = ssub.s32 256, 256
      %18 = vsyncadd [#allocation3], %s17
      %s19 = smul.addr %s15, 128
      %s20 = scalar_lea.hbm %s0, %s19
      %s21 = sshll.u32 [#allocation2], 4
      %s22 = int_to_ptr.vmem [resolvable:$true] %s21
      %27 = dma.hbm_to_vmem [thread:$0]  %s20, 256, %s22, [#allocation3], 128, 128, 8
    $region5: #{tpu_custom_call.1} parent=1 // pred_fallthru
      _
    // Predicated region
    $region6: #{tpu_custom_call.1} parent=1 // pred_check
      _
    $region7: #{tpu_custom_call.1} parent=1 // pred_check_branch
      %29 = sbr.rel (0) target = $region9
    $region8: #{tpu_custom_call.1} parent=1 // pred_region
      %s30 = sadd.s32 0, 0
      %p31 = scmp.lt.s32.totalorder %s30, 0
      %s32 = scalar_select %p31, %s30, 0
      %s33 = smul.u32 2, %s32
      %s35 = ssub.s32 256, 256
      %36 = vsyncadd [#allocation6], %s35
      %s37 = smul.addr %s33, 128
      %s38 = scalar_lea.hbm %s1, %s37
      %s39 = sshll.u32 [#allocation5], 4
      %s40 = int_to_ptr.vmem [resolvable:$true] %s39
      %45 = dma.hbm_to_vmem [thread:$0]  %s38, 256, %s40, [#allocation6], 128, 128, 8
    $region9: #{tpu_custom_call.1} parent=1 // pred_fallthru
      _
    // Predicated region
    $region10: #{tpu_custom_call.1} parent=1 // pred_check
      _
    $region11: #{tpu_custom_call.1} parent=1 // pred_check_branch
      %47 = sbr.rel (0) target = $region13
    $region12: #{tpu_custom_call.1} parent=1 // pred_region
      %48 = dma.done [#allocation3], 256
    $region13: #{tpu_custom_call.1} parent=1 // pred_fallthru
      _
    // Predicated region
    $region14: #{tpu_custom_call.1} parent=1 // pred_check
      _
    $region15: #{tpu_custom_call.1} parent=1 // pred_check_branch
      %50 = sbr.rel (0) target = $region17
    $region16: #{tpu_custom_call.1} parent=1 // pred_region
      %51 = dma.done [#allocation6], 256
    $region17: #{tpu_custom_call.1} parent=1 // pred_fallthru
      _
    %s52 = sadd.s32 0, 0
    %p53 = scmp.lt.s32.totalorder %s52, 0
    %s54 = scalar_select %p53, %s52, 0
    %s55 = smul.u32 2, %s54
    %s56 = sadd.s32 0, 0
    %p57 = scmp.lt.s32.totalorder %s56, 0
    %s58 = scalar_select %p57, %s56, 0
    %s59 = smul.u32 2, %s58
    %v60 = vld [vmem:[#allocation2] sm:$0xff]
    %v61 = vld [vmem:[#allocation2 + $0x8] sm:$0xff]
    %v62 = vld [vmem:[#allocation5] sm:$0xff]
    %v63 = vld [vmem:[#allocation5 + $0x8] sm:$0xff]
    %v64 = vsub.f32 %v60, %v62
    %v65 = vsub.f32 %v61, %v63
    %v66 = vmul.f32 %v64, %v64
    %v67 = vmul.f32 %v65, %v65
    %p68 = scmp.eq.s32.totalorder 0, 0
    // Predicated region
    $region18: #{tpu_custom_call.1} parent=1 // pred_check
      %p69 = pneg %p68
    $region19: #{tpu_custom_call.1} parent=1 // pred_check_branch
      %71 = sbr.rel (%p69) target = $region21
    $region20: #{tpu_custom_call.1} parent=1 // pred_region
      %72 = vst [vmem:[#allocation7] sm:$0xff] %v66
      %73 = vst [vmem:[#allocation7 + $0x8] sm:$0xff] %v67
    $region21: #{tpu_custom_call.1} parent=1 // pred_fallthru
      _
    %p74 = scmp.ne.s32.totalorder 0, 0
    // Predicated region
    $region22: #{tpu_custom_call.1} parent=1 // pred_check
      %p75 = pneg %p74
    $region23: #{tpu_custom_call.1} parent=1 // pred_check_branch
      %77 = sbr.rel (%p75) target = $region25
    $region24: #{tpu_custom_call.1} parent=1 // pred_region
      %v78 = vld [vmem:[#allocation7] sm:$0xff]
      %v79 = vld [vmem:[#allocation7 + $0x8] sm:$0xff]
      %v80 = vadd.f32 %v78, %v66
      %v81 = vadd.f32 %v79, %v67
      %82 = vst [vmem:[#allocation7] sm:$0xff] %v80
      %83 = vst [vmem:[#allocation7 + $0x8] sm:$0xff] %v81
    $region25: #{tpu_custom_call.1} parent=1 // pred_fallthru
      _
    // Predicated region
    $region26: #{tpu_custom_call.1} parent=1 // pred_check
      _
    $region27: #{tpu_custom_call.1} parent=1 // pred_check_branch
      %85 = sbr.rel (0) target = $region29
    $region28: #{tpu_custom_call.1} parent=1 // pred_region
      %s87 = ssub.s32 256, 256
      %88 = vsyncadd [#allocation4], %s87
      %s89 = sshll.u32 [#allocation7], 4
      %s90 = int_to_ptr.vmem [resolvable:$true] %s89
      %95 = dma.vmem_to_hbm [thread:$0]  %s90, 256, %s2, [#allocation4], 128, 128, 8
    $region29: #{tpu_custom_call.1} parent=1 // pred_fallthru
      _
    // Predicated region
    $region30: #{tpu_custom_call.1} parent=1 // pred_check
      _
    $region31: #{tpu_custom_call.1} parent=1 // pred_check_branch
      %97 = sbr.rel (0) target = $region33
    $region32: #{tpu_custom_call.1} parent=1 // pred_region
      %98 = dma.done [#allocation4], 256
    $region33: #{tpu_custom_call.1} parent=1 // pred_fallthru
      _
    %99 = vsyncpa [#allocation3], 1
    %100 = vsyncpa [#allocation6], 1
    %101 = vsyncpa [#allocation4], 1

</llo_original>
